<compile_context>
chip_gen: v7x
topology: tpu7x:2x2x1
jax: 0.10.0
libtpu: 0.0.40
codegen_flags: <defaults>
</compile_context>

<pallas_src>
import functools

import jax
import jax.numpy as jnp
from jax import lax
from jax.experimental import pallas as pl
from jax.experimental.pallas import tpu as pltpu

EPS = 1e-5
_INV_SQRT2 = 0.7071067811865476


def _erf(z):
    """Abramowitz & Stegun 7.1.26 erf polynomial (max abs err ~1.5e-7)."""
    a1, a2, a3 = 0.254829592, -0.284496736, 1.421413741
    a4, a5, pp = -1.453152027, 1.061405429, 0.3275911
    az = jnp.abs(z)
    t = pl.reciprocal(1.0 + pp * az, approx=True)     # EUP vrcp; VALU slots stay free
    poly = ((((a5 * t + a4) * t + a3) * t + a2) * t + a1) * t
    e = 1.0 - poly * jnp.exp(-az * az)
    return jnp.where(z >= 0, e, -e)


def _gelu_exact(x):
    return 0.5 * x * (1.0 + _erf(x * _INV_SQRT2))


def _conv3x3_gn_gelu_kernel(x_ref, w_ref, gn_ref, o_ref, *, n_b, cout, p):
    """B samples: one K=9*Cin matmul each + GroupNorm(1) + exact GELU."""
    w = w_ref[...]                                    # (Cout, 9*Cin) bf16, resident slab
    gamma = gn_ref[:, 0:1]                            # (Cout, 1)
    beta = gn_ref[:, 1:2]                             # (Cout, 1)
    inv_cnt = 1.0 / float(cout * p)
    for b in range(n_b):                              # static unroll; B is small
        # Single folded-tap matmul on the MXU: (Cout, K) x (K, H*W) -> (Cout, H*W), f32 acc.
        acc = jnp.dot(w, x_ref[b], preferred_element_type=jnp.float32)

        # GroupNorm(num_groups=1): per-sample stats over (Cout, H*W), shifted two-pass var.
        mean = jnp.sum(acc, keepdims=True) * inv_cnt                  # (1, 1)
        centered = acc - mean
        var = jnp.sum(centered * centered, keepdims=True) * inv_cnt   # (1, 1), biased
        inv = lax.rsqrt(var + EPS)
        y = centered * inv * gamma + beta

        # TODO(synk): Dropout(droprate > 0) not implemented; module default 0.0 -> identity.
        o_ref[b] = _gelu_exact(y)                     # lane-dense (Cout, H*W) store


def _vmem_limit_bytes():
    """Generation-aware scoped-VMEM cap (~75% of physical, <= 100 MiB)."""
    try:
        cap = int(pltpu.get_tpu_info().vmem_capacity_bytes)
    except Exception:
        cap = 64 * 1024 * 1024                        # v7x-safe fallback
    return int(min(cap * 3 // 4, 100 * 1024 * 1024))


def _choose_samples_per_step(n, k, p, cout, vmem_limit):
    """Largest per-step batch that keeps >= 2 grid steps (feeds both v7x TCs) and fits VMEM."""
    # double-buffered bf16 input block + double-buffered f32 output block + f32 accumulator
    per_sample = 2 * k * p * 2 + 2 * cout * p * 4 + cout * p * 4
    budget = max(vmem_limit // 2, per_sample)         # headroom for weights / internal scratch
    max_b = max(1, budget // per_sample)
    best = 1
    for cand in range(1, n + 1):
        if n % cand != 0 or cand > max_b:
            continue
        if n // cand >= 2 or n == 1:
            best = cand
    return best


def conv3x3_forward(x_nchw, weight, gamma, beta):
    """Conv3x3 module forward. x: (N, Cin, H, W); weight: (Cout, Cin, 3, 3). Returns NCHW f32."""
    n, cin, h, w = x_nchw.shape
    cout = weight.shape[0]
    p_rows = h * w
    k_dim = 9 * cin

    # Wrapper-side im2col: zero-pad, gather the 9 shifted taps, flatten to a lane-dense
    # (N, 9*Cin, H*W) RHS and cast to bf16 ONCE (before any layout work).
    x_pad = jnp.pad(x_nchw, ((0, 0), (0, 0), (1, 1), (1, 1)))
    taps = [x_pad[:, :, di:di + h, dj:dj + w] for di in range(3) for dj in range(3)]
    x_col = jnp.stack(taps, axis=1).reshape(n, k_dim, p_rows).astype(jnp.bfloat16)

    # OIHW -> one resident (Cout, 9*Cin) bf16 weight slab; K order = (kh, kw, cin) to
    # match the im2col ordering above.  gamma/beta packed into one (Cout, 2) block.
    w_flat = jnp.transpose(weight, (0, 2, 3, 1)).reshape(cout, k_dim).astype(jnp.bfloat16)
    gn_params = jnp.stack([gamma, beta], axis=1).astype(jnp.float32)

    vmem_limit = _vmem_limit_bytes()
    n_b = _choose_samples_per_step(n, k_dim, p_rows, cout, vmem_limit)
    n_steps = n // n_b

    kernel = functools.partial(_conv3x3_gn_gelu_kernel, n_b=n_b, cout=cout, p=p_rows)
    out = pl.pallas_call(
        kernel,
        out_shape=jax.ShapeDtypeStruct((n, cout, p_rows), jnp.float32),
        grid=(n_steps,),
        in_specs=[
            pl.BlockSpec((n_b, k_dim, p_rows), lambda i: (i, 0, 0)),
            pl.BlockSpec((cout, k_dim), lambda i: (0, 0)),
            pl.BlockSpec((cout, 2), lambda i: (0, 0)),
        ],
        out_specs=pl.BlockSpec((n_b, cout, p_rows), lambda i: (i, 0, 0)),
        compiler_params=pltpu.CompilerParams(
            dimension_semantics=("parallel",),
            vmem_limit_bytes=vmem_limit,
        ),
    )(x_col, w_flat, gn_params)

    # (N, Cout, H*W) -> NCHW is a free row-major reshape (no transpose).
    return out.reshape(n, cout, h, w)


# --------------------------- pure-JAX reference ----------------------------- #
def _ref_forward(x, weight, gamma, beta):
    dn = ("NCHW", "OIHW", "NCHW")
    y = lax.conv_general_dilated(x, weight, (1, 1), [(1, 1), (1, 1)],
                                 dimension_numbers=dn)
    mean = y.mean(axis=(1, 2, 3), keepdims=True)
    var = ((y - mean) ** 2).mean(axis=(1, 2, 3), keepdims=True)
    yn = (y - mean) / jnp.sqrt(var + EPS)
    yn = yn * gamma[None, :, None, None] + beta[None, :, None, None]
    # Dropout(p=0.0) is the identity.
    return jax.nn.gelu(yn, approximate=False)


# ----------------------------------- main ----------------------------------- #
if __name__ == "__main__":
    N, CIN, COUT, H, W = 2, 4, 8, 16, 16
    key = jax.random.PRNGKey(0)
    ks = jax.random.split(key, 4)

    x = jax.random.normal(ks[0], (N, CIN, H, W), jnp.float32)
    weight = 0.1 * jax.random.normal(ks[1], (COUT, CIN, 3, 3), jnp.float32)   # bias=False
    gamma = 1.0 + 0.1 * jax.random.normal(ks[2], (COUT,), jnp.float32)
    beta = 0.1 * jax.random.normal(ks[3], (COUT,), jnp.float32)

    out = jax.block_until_ready(conv3x3_forward(x, weight, gamma, beta))
    ref = jax.block_until_ready(_ref_forward(x, weight, gamma, beta))

    assert out.shape == (N, COUT, H, W), out.shape
    # bf16 matmul inputs (f32 accumulate) vs. f32 reference -> slightly relaxed tolerance.
    assert jnp.allclose(out, ref, atol=3e-2, rtol=3e-2), \
        float(jnp.max(jnp.abs(out - ref)))
    print("KERNEL_OK")
</pallas_src>

<mosaic_0001>
module attributes {stable_mosaic.version = 11 : i64} {
  func.func @_conv3x3_gn_gelu_kernel(%arg0: i32, %arg1: memref<1x36x256xbf16, #tpu.memory_space<vmem>>, %arg2: memref<8x36xbf16, #tpu.memory_space<vmem>>, %arg3: memref<8x2xf32, #tpu.memory_space<vmem>>, %arg4: memref<1x8x256xf32, #tpu.memory_space<vmem>>) attributes {dimension_semantics = [#tpu.dimension_semantics<parallel>], iteration_bounds = array<i64: 2>, scalar_prefetch = 0 : i64, scratch_operands = 0 : i64, tpu.core_type = #tpu.core_type<tc>, window_params = [{transform_indices = @transform_0, window_bounds = array<i64: 1, 36, 256>}, {pipeline_mode = #tpu.pipeline_mode<synchronous>, transform_indices = @transform_1, window_bounds = array<i64: 8, 36>}, {pipeline_mode = #tpu.pipeline_mode<synchronous>, transform_indices = @transform_2, window_bounds = array<i64: 8, 2>}, {transform_indices = @transform_3, window_bounds = array<i64: 1, 8, 256>}]} {
    %c0 = arith.constant 0 : index
    %c0_0 = arith.constant 0 : index
    %0 = vector.load %arg2[%c0, %c0_0] : memref<8x36xbf16, #tpu.memory_space<vmem>>, vector<8x36xbf16>
    %c0_1 = arith.constant 0 : index
    %c0_2 = arith.constant 0 : index
    %1 = vector.load %arg3[%c0_1, %c0_2] : memref<8x2xf32, #tpu.memory_space<vmem>>, vector<8x1xf32>
    %c0_3 = arith.constant 0 : index
    %c1 = arith.constant 1 : index
    %2 = vector.load %arg3[%c0_3, %c1] : memref<8x2xf32, #tpu.memory_space<vmem>>, vector<8x1xf32>
    %c0_4 = arith.constant 0 : index
    %c0_5 = arith.constant 0 : index
    %c0_6 = arith.constant 0 : index
    %3 = vector.load %arg1[%c0_4, %c0_5, %c0_6] : memref<1x36x256xbf16, #tpu.memory_space<vmem>>, vector<1x36x256xbf16>
    %4 = vector.shape_cast %3 : vector<1x36x256xbf16> to vector<36x256xbf16>
    %cst = arith.constant dense<0.000000e+00> : vector<8x256xf32>
    %5 = tpu.matmul %0, %4, %cst {dimension_numbers = #tpu.dot_dimension_numbers<[1], [0], [0], [1], [0, 0, 1, 1], [], []>} : vector<8x36xbf16>, vector<36x256xbf16>, vector<8x256xf32> -> vector<8x256xf32>
    %6 = vector.shape_cast %5 : vector<8x256xf32> to vector<1x8x256xf32>
    %cst_7 = arith.constant dense<0.000000e+00> : vector<1xf32>
    %7 = vector.multi_reduction <add>, %6, %cst_7 [1, 2] : vector<1x8x256xf32> to vector<1xf32>
    %8 = vector.shape_cast %7 : vector<1xf32> to vector<1x1x1xf32>
    %9 = vector.extract %8[0, 0, 0] : f32 from vector<1x1x1xf32>
    %10 = vector.broadcast %9 : f32 to vector<1x1xf32>
    %cst_8 = arith.constant 4.8828125E-4 : f32
    %11 = vector.broadcast %cst_8 : f32 to vector<1x1xf32>
    %12 = arith.mulf %10, %11 : vector<1x1xf32>
    %13 = vector.broadcast %12 : vector<1x1xf32> to vector<8x256xf32>
    %14 = arith.subf %5, %13 : vector<8x256xf32>
    %15 = arith.mulf %14, %14 : vector<8x256xf32>
    %16 = vector.shape_cast %15 : vector<8x256xf32> to vector<1x8x256xf32>
    %cst_9 = arith.constant dense<0.000000e+00> : vector<1xf32>
    %17 = vector.multi_reduction <add>, %16, %cst_9 [1, 2] : vector<1x8x256xf32> to vector<1xf32>
    %18 = vector.shape_cast %17 : vector<1xf32> to vector<1x1x1xf32>
    %19 = vector.extract %18[0, 0, 0] : f32 from vector<1x1x1xf32>
    %20 = vector.broadcast %19 : f32 to vector<1x1xf32>
    %cst_10 = arith.constant 4.8828125E-4 : f32
    %21 = vector.broadcast %cst_10 : f32 to vector<1x1xf32>
    %22 = arith.mulf %20, %21 : vector<1x1xf32>
    %cst_11 = arith.constant 9.99999974E-6 : f32
    %23 = vector.broadcast %cst_11 : f32 to vector<1x1xf32>
    %24 = arith.addf %22, %23 : vector<1x1xf32>
    %25 = math.rsqrt %24 : vector<1x1xf32>
    %26 = vector.broadcast %25 : vector<1x1xf32> to vector<8x256xf32>
    %27 = arith.mulf %14, %26 : vector<8x256xf32>
    %28 = vector.broadcast %1 : vector<8x1xf32> to vector<8x256xf32>
    %29 = arith.mulf %27, %28 : vector<8x256xf32>
    %30 = vector.broadcast %2 : vector<8x1xf32> to vector<8x256xf32>
    %31 = arith.addf %29, %30 : vector<8x256xf32>
    %cst_12 = arith.constant 5.000000e-01 : f32
    %32 = vector.broadcast %cst_12 : f32 to vector<8x256xf32>
    %33 = arith.mulf %32, %31 : vector<8x256xf32>
    %cst_13 = arith.constant 0.707106769 : f32
    %34 = vector.broadcast %cst_13 : f32 to vector<8x256xf32>
    %35 = arith.mulf %31, %34 : vector<8x256xf32>
    %36 = math.absf %35 : vector<8x256xf32>
    %cst_14 = arith.constant 0.327591091 : f32
    %37 = vector.broadcast %cst_14 : f32 to vector<8x256xf32>
    %38 = arith.mulf %37, %36 : vector<8x256xf32>
    %cst_15 = arith.constant 1.000000e+00 : f32
    %39 = vector.broadcast %cst_15 : f32 to vector<8x256xf32>
    %40 = arith.addf %39, %38 : vector<8x256xf32>
    %41 = tpu.reciprocal %40 {approx = true} : vector<8x256xf32> -> vector<8x256xf32>
    %cst_16 = arith.constant 1.06140542 : f32
    %42 = vector.broadcast %cst_16 : f32 to vector<8x256xf32>
    %43 = arith.mulf %42, %41 : vector<8x256xf32>
    %cst_17 = arith.constant -1.45315206 : f32
    %44 = vector.broadcast %cst_17 : f32 to vector<8x256xf32>
    %45 = arith.addf %43, %44 : vector<8x256xf32>
    %46 = arith.mulf %45, %41 : vector<8x256xf32>
    %cst_18 = arith.constant 1.42141378 : f32
    %47 = vector.broadcast %cst_18 : f32 to vector<8x256xf32>
    %48 = arith.addf %46, %47 : vector<8x256xf32>
    %49 = arith.mulf %48, %41 : vector<8x256xf32>
    %cst_19 = arith.constant -0.284496725 : f32
    %50 = vector.broadcast %cst_19 : f32 to vector<8x256xf32>
    %51 = arith.addf %49, %50 : vector<8x256xf32>
    %52 = arith.mulf %51, %41 : vector<8x256xf32>
    %cst_20 = arith.constant 0.254829586 : f32
    %53 = vector.broadcast %cst_20 : f32 to vector<8x256xf32>
    %54 = arith.addf %52, %53 : vector<8x256xf32>
    %55 = arith.mulf %54, %41 : vector<8x256xf32>
    %cst_21 = arith.constant 0.000000e+00 : f32
    %56 = vector.broadcast %cst_21 : f32 to vector<8x256xf32>
    %57 = arith.subf %56, %36 : vector<8x256xf32>
    %58 = arith.mulf %57, %36 : vector<8x256xf32>
    %59 = math.exp %58 : vector<8x256xf32>
    %60 = arith.mulf %55, %59 : vector<8x256xf32>
    %cst_22 = arith.constant 1.000000e+00 : f32
    %61 = vector.broadcast %cst_22 : f32 to vector<8x256xf32>
    %62 = arith.subf %61, %60 : vector<8x256xf32>
    %cst_23 = arith.constant 0.000000e+00 : f32
    %63 = vector.broadcast %cst_23 : f32 to vector<8x256xf32>
    %64 = arith.cmpf oge, %35, %63 : vector<8x256xf32>
    %cst_24 = arith.constant 0.000000e+00 : f32
    %65 = vector.broadcast %cst_24 : f32 to vector<8x256xf32>
    %66 = arith.subf %65, %62 : vector<8x256xf32>
    %67 = arith.select %64, %62, %66 : vector<8x256xi1>, vector<8x256xf32>
    %cst_25 = arith.constant 1.000000e+00 : f32
    %68 = vector.broadcast %cst_25 : f32 to vector<8x256xf32>
    %69 = arith.addf %68, %67 : vector<8x256xf32>
    %70 = arith.mulf %33, %69 : vector<8x256xf32>
    %c0_26 = arith.constant 0 : index
    %c0_27 = arith.constant 0 : index
    %c0_28 = arith.constant 0 : index
    %71 = vector.load %arg4[%c0_26, %c0_27, %c0_28] : memref<1x8x256xf32, #tpu.memory_space<vmem>>, vector<1x8x256xf32>
    %72 = vector.shape_cast %71 : vector<1x8x256xf32> to vector<8x256xf32>
    %73 = vector.shape_cast %70 : vector<8x256xf32> to vector<1x8x256xf32>
    tpu.vector_store %arg4[%c0_26, %c0_27, %c0_28], %73 {strides = array<i32>} : memref<1x8x256xf32, #tpu.memory_space<vmem>>, vector<1x8x256xf32>,
    return
  }
  func.func @transform_0(%arg0: i32) -> (i32, i32, i32) {
    %c0_i32 = arith.constant 0 : i32
    %c0_i32_0 = arith.constant 0 : i32
    %c0_i32_1 = arith.constant 0 : i32
    return %arg0, %c0_i32, %c0_i32_0 : i32, i32, i32
  }
  func.func @transform_1(%arg0: i32) -> (i32, i32) {
    %c0_i32 = arith.constant 0 : i32
    %c0_i32_0 = arith.constant 0 : i32
    %c0_i32_1 = arith.constant 0 : i32
    return %c0_i32, %c0_i32_0 : i32, i32
  }
  func.func @transform_2(%arg0: i32) -> (i32, i32) {
    %c0_i32 = arith.constant 0 : i32
    %c0_i32_0 = arith.constant 0 : i32
    %c0_i32_1 = arith.constant 0 : i32
    return %c0_i32, %c0_i32_0 : i32, i32
  }
  func.func @transform_3(%arg0: i32) -> (i32, i32, i32) {
    %c0_i32 = arith.constant 0 : i32
    %c0_i32_0 = arith.constant 0 : i32
    %c0_i32_1 = arith.constant 0 : i32
    return %arg0, %c0_i32, %c0_i32_0 : i32, i32, i32
  }
}

</mosaic_0001>

<llo_original>
// kernel: tpu_custom_call.1
$region0: #{tpu_custom_call.1}
  #allocation0 [shape = 'u32[]', space=smem, size = 0x4, offset = 0x4, fixed_abs, tag = 'smem constant byte address 0x4 - core index']
  #allocation1 [shape = 'u32[144,128]{1,0:T(1,128)}', space=vmem, size = 0x12000, scoped, tag = 'internal scratch']
  %s0 = inlined_call_operand.vmem [shape: bf16[2,36,256], index: 0, kind: input, shape index: {}]
  %s1 = inlined_call_operand.vmem [shape: bf16[8,36], index: 1, kind: input, shape index: {}]
  %s2 = inlined_call_operand.vmem [shape: f32[8,2], index: 2, kind: input, shape index: {}]
  %s3 = inlined_call_operand.hbm [shape: f32[2,8,256], index: 3, kind: output, shape index: {}]
  %s4 = sld [smem:[#allocation0]]
  $region45: #{tpu_custom_call.1} parent=0
    _
  %s6 = ssub.s32 1, %s4
  %s7 = scalar_select 0, %s6, %s4
  $region1: #{tpu_custom_call.1} parent=0
    #allocation2 [shape = 'u8[16384]{0}', space=vmem, size = 0x4000, scoped, tag = 'output window, operand 0']
    #allocation3 [shape = 's32[2]{0}', space=sflag, size = 0x8, scoped, tag = 'scoped memory for tpu_custom_call.1']
    %8 = vsyncpa [#allocation3], 0
    %s9 = scalar_lea.sflag [#allocation3], 1
    %10 = vsyncpa %s9, 0
    loop: start=0, step=1, limit=4
    $region2: #{tpu_custom_call.1} parent=1 // loop_pre_header
      _
    $region3: #{tpu_custom_call.1} parent=1 // loop_header
      %s12 = sphi 0, %s16
      %p13 = scmp.ge.s32.totalorder %s12, 4
      %s22 = sphi 0, %s24
      %s25 = sphi 0, %s22
      %s26 = sphi 0, %s25
      %s42 = sphi 0, %s26
      %s46 = sphi 0, %s46
      %s48 = sphi 0, %s46
      %s49 = sphi 0, %s48
      %s63 = sphi 0, %s49
      %s67 = sphi 0, %s67
      %s69 = sphi 0, %s67
      %s70 = sphi 0, %s69
      %s84 = sphi 0, %s70
      %s90 = sphi 0, %s92
      %s93 = sphi 0, %s90
      %s94 = sphi 0, %s93
      %s110 = sphi 0, %s94
    $region4: #{tpu_custom_call.1} parent=1 // loop_header_branch
      %15 = sbr.rel (%p13) target = $region8
    $region5: #{tpu_custom_call.1} parent=1 // loop_body
      %s17 = ssub.s32 %s12, 1
      %s18 = ssub.s32 %s12, 2
      %s19 = sadd.s32 %s12, 1
      %s20 = ssub.s32 %s12, %s19
      %p21 = scmp.eq.s32.totalorder %s20, 0
      %s23 = sadd.s32 %s22, 1
      %s24 = scalar_select %p21, %s22, %s23
      %p27 = pneg %p21
      %p28 = scmp.eq.s32.totalorder %s12, 1
      %p29 = por %p27, %p28
      %p30 = scmp.ne.s32.totalorder %s22, %s25
      %p31 = scmp.eq.s32.totalorder %s12, 0
      %p32 = por %p30, %p31
      %p33 = scmp.ne.s32.totalorder %s22, %s25
      %p34 = scmp.eq.s32.totalorder %s17, 1
      %p35 = por %p33, %p34
      %p36 = scmp.ne.s32.totalorder %s25, %s26
      %p37 = scmp.eq.s32.totalorder %s17, 0
      %p38 = por %p36, %p37
      %p39 = scmp.ne.s32.totalorder %s25, %s26
      %p40 = scmp.eq.s32.totalorder %s18, 1
      %p41 = por %p39, %p40
      %p43 = scmp.ne.s32.totalorder %s26, %s42
      %p44 = scmp.eq.s32.totalorder %s18, 0
      %p45 = por %p43, %p44
      %s47 = sadd.s32 %s46, 1
      %p50 = scmp.eq.s32.totalorder %s12, 1
      %p51 = scmp.ne.s32.totalorder %s46, %s48
      %p52 = scmp.eq.s32.totalorder %s12, 0
      %p53 = por %p51, %p52
      %p54 = scmp.ne.s32.totalorder %s46, %s48
      %p55 = scmp.eq.s32.totalorder %s17, 1
      %p56 = por %p54, %p55
      %p57 = scmp.ne.s32.totalorder %s48, %s49
      %p58 = scmp.eq.s32.totalorder %s17, 0
      %p59 = por %p57, %p58
      %p60 = scmp.ne.s32.totalorder %s48, %s49
      %p61 = scmp.eq.s32.totalorder %s18, 1
      %p62 = por %p60, %p61
      %p64 = scmp.ne.s32.totalorder %s49, %s63
      %p65 = scmp.eq.s32.totalorder %s18, 0
      %p66 = por %p64, %p65
      %s68 = sadd.s32 %s67, 1
      %p71 = scmp.eq.s32.totalorder %s12, 1
      %p72 = scmp.ne.s32.totalorder %s67, %s69
      %p73 = scmp.eq.s32.totalorder %s12, 0
      %p74 = por %p72, %p73
      %p75 = scmp.ne.s32.totalorder %s67, %s69
      %p76 = scmp.eq.s32.totalorder %s17, 1
      %p77 = por %p75, %p76
      %p78 = scmp.ne.s32.totalorder %s69, %s70
      %p79 = scmp.eq.s32.totalorder %s17, 0
      %p80 = por %p78, %p79
      %p81 = scmp.ne.s32.totalorder %s69, %s70
      %p82 = scmp.eq.s32.totalorder %s18, 1
      %p83 = por %p81, %p82
      %p85 = scmp.ne.s32.totalorder %s70, %s84
      %p86 = scmp.eq.s32.totalorder %s18, 0
      %p87 = por %p85, %p86
      %s88 = ssub.s32 %s12, %s19
      %p89 = scmp.eq.s32.totalorder %s88, 0
      %s91 = sadd.s32 %s90, 1
      %s92 = scalar_select %p89, %s90, %s91
      %p95 = pneg %p89
      %p96 = scmp.eq.s32.totalorder %s12, 1
      %p97 = por %p95, %p96
      %p98 = scmp.ne.s32.totalorder %s90, %s93
      %p99 = scmp.eq.s32.totalorder %s12, 0
      %p100 = por %p98, %p99
      %p101 = scmp.ne.s32.totalorder %s90, %s93
      %p102 = scmp.eq.s32.totalorder %s17, 1
      %p103 = por %p101, %p102
      %p104 = scmp.ne.s32.totalorder %s93, %s94
      %p105 = scmp.eq.s32.totalorder %s17, 0
      %p106 = por %p104, %p105
      %p107 = scmp.ne.s32.totalorder %s93, %s94
      %p108 = scmp.eq.s32.totalorder %s18, 1
      %p109 = por %p107, %p108
      %p111 = scmp.ne.s32.totalorder %s94, %s110
      %p112 = scmp.eq.s32.totalorder %s18, 0
      %p113 = por %p111, %p112
      %p114 = scmp.le.s32.totalorder 1, %s12
      %p115 = scmp.lt.s32.totalorder %s12, 3
      %p116 = pnand %p114, %p115
      %p117 = pneg %p116
      // Predicated region
      $region9: #{tpu_custom_call.1} parent=5 // pred_check
        _
      $region10: #{tpu_custom_call.1} parent=5 // pred_check_branch
        %119 = sbr.rel (%p116) target = $region12
      $region11: #{tpu_custom_call.1} parent=5 // pred_region
        %s120 = ssub.s32 %s12, 1
        // Predicated region
        $region13: #{tpu_custom_call.1} parent=11 // pred_check
          %p121 = pneg %p59
        $region14: #{tpu_custom_call.1} parent=11 // pred_check_branch
          %123 = sbr.rel (%p121) target = $region16
        $region15: #{tpu_custom_call.1} parent=11 // pred_region
          _
        $region16: #{tpu_custom_call.1} parent=11 // pred_fallthru
          _
        // Predicated region
        $region17: #{tpu_custom_call.1} parent=11 // pred_check
          %p124 = pneg %p80
        $region18: #{tpu_custom_call.1} parent=11 // pred_check_branch
          %126 = sbr.rel (%p124) target = $region20
        $region19: #{tpu_custom_call.1} parent=11 // pred_region
          _
        $region20: #{tpu_custom_call.1} parent=11 // pred_fallthru
          _
      $region12: #{tpu_custom_call.1} parent=5 // pred_fallthru
        _
      %p127 = scmp.lt.s32.totalorder %s12, 2
      // Predicated region
      $region21: #{tpu_custom_call.1} parent=5 // pred_check
        %p128 = pneg %p127
      $region22: #{tpu_custom_call.1} parent=5 // pred_check_branch
        %130 = sbr.rel (%p128) target = $region24
      $region23: #{tpu_custom_call.1} parent=5 // pred_region
        // Predicated region
        $region25: #{tpu_custom_call.1} parent=23 // pred_check
          %p131 = pneg %p32
        $region26: #{tpu_custom_call.1} parent=23 // pred_check_branch
          %133 = sbr.rel (%p131) target = $region28
        $region27: #{tpu_custom_call.1} parent=23 // pred_region
          %p134 = scmp.lt.s32.totalorder %s12, 1
          %s135 = scalar_select %p134, %s12, 1
          %s136 = smul.addr %s135, 10
          %s137 = smul.addr %s136, 4
          %s138 = scalar_lea.vmem %s0, %s137
        $region28: #{tpu_custom_call.1} parent=23 // pred_fallthru
          _
      $region24: #{tpu_custom_call.1} parent=5 // pred_fallthru
        _
      %p139 = scmp.le.s32.totalorder 1, %s12
      %p140 = scmp.lt.s32.totalorder %s12, 3
      %p141 = pnand %p139, %p140
      %p142 = pneg %p141
      // Predicated region
      $region29: #{tpu_custom_call.1} parent=5 // pred_check
        _
      $region30: #{tpu_custom_call.1} parent=5 // pred_check_branch
        %144 = sbr.rel (%p141) target = $region32
      $region31: #{tpu_custom_call.1} parent=5 // pred_region
        %s145 = ssub.s32 %s12, 1
        %p146 = scmp.lt.s32.totalorder %s17, 1
        %s147 = scalar_select %p146, %s17, 1
        %s148 = smul.addr %s147, 10
        %s149 = smul.addr %s148, 4
        %s150 = scalar_lea.vmem %s0, %s149
        %p151 = pneg %p38
        %p152 = pneg %p35
        %p153 = pneg %p59
        %p154 = pneg %p56
        %p155 = pneg %p80
        %p156 = pneg %p77
        %p157 = pneg %p106
        %p158 = pneg %p103
        %s159 = sand.u32 %s93, 1
        %s160 = scalar_lea.sflag [#allocation3], %s159
        %s161 = sand.u32 %s93, 1
        %s162 = smul.addr %s161, 16
        %s163 = scalar_lea.vmem [#allocation2], %s162
        %p164 = scmp.lt.s32.totalorder %s17, 1
        %s165 = scalar_select %p164, %s17, 1
        %s166 = smul.addr %s165, 10
        %s167 = smul.addr %s166, 4
        %s168 = scalar_lea.vmem %s0, %s167
        %v170 = vld [vmem:[%s1] sm:$0xf]
        %v171 = vld [vmem:[%s2] sm:$0xff]
        %v172 = vld [vmem:[%s168] sm:$0xff]
        %v173 = vld [vmem:[%s168 + $0x8] sm:$0xff]
        %v174 = vld [vmem:[%s168 + $0x10] sm:$0xff]
        %v175 = vld [vmem:[%s168 + $0x18] sm:$0xff]
        %v176 = vld [vmem:[%s168 + $0x20] sm:$0x33]
        %v182 = vunpack.c.l.b16 %v172
        %v183 = vunpack.c.h.b16 %v172
        %v184 = vunpack.c.l.b16 %v173
        %v185 = vunpack.c.h.b16 %v173
        %v186 = vunpack.c.l.b16 %v174
        %v187 = vunpack.c.h.b16 %v174
        %v188 = vunpack.c.l.b16 %v175
        %v189 = vunpack.c.h.b16 %v175
        %v190 = vunpack.c.l.b16 %v176
        %v191 = vunpack.c.h.b16 %v176
        %v192 = vpack.c.b16 %v184, %v182
        %v193 = vpack.c.b16 %v185, %v183
        %v194 = vpack.c.b16 %v188, %v186
        %v195 = vpack.c.b16 %v189, %v187
        %v196 = vpack.c.b16 %v190, %v190
        %v197 = vpack.c.b16 %v191, %v191
        %vm202 = vcmask 293888
        %v204 = vsel %vm202, %v170, 0
        %vm206 = vcmask 1041408
        %v208 = vsel %vm206, %v196, 0
        %v211 = vsel %vm206, %v197, 0
        %213 = vmatprep.subr.bf16.mxu0 %v193
        %214 = vmatpush1.bf16.msra.mxu0 %v192
        %215 = vmatprep.subr.bf16.mxu0 %v195
        %216 = vmatpush1.bf16.msra.mxu0 %v194
        %217 = vmatprep.subr.bf16.mxu0 %v211
        %218 = vmatpush1.bf16.msra.mxu0 %v208
        %219 = vmatprep.subr.bf16.mxu0 0
        %220 = vmatpush1.bf16.msra.mxu0 0
        %221 = vmatprep.subr.bf16.mxu0 0
        %222 = vmatpush1.bf16.msra.mxu0 0
        %223 = vmatprep.subr.bf16.mxu0 0
        %224 = vmatpush1.bf16.msra.mxu0 0
        %225 = vmatprep.subr.bf16.mxu0 0
        %226 = vmatpush1.bf16.msra.mxu0 0
        %227 = vmatprep.subr.bf16.mxu0 0
        %228 = vmatpush1.bf16.msra.mxu0 0
        %229 = vmatprep.subr.bf16.mxu0 0
        %230 = vmatpush1.bf16.msra.mxu0 0
        %231 = vmatprep.subr.bf16.mxu0 0
        %232 = vmatpush1.bf16.msra.mxu0 0
        %233 = vmatprep.subr.bf16.mxu0 0
        %234 = vmatpush1.bf16.msra.mxu0 0
        %235 = vmatprep.subr.bf16.mxu0 0
        %236 = vmatpush1.bf16.msra.mxu0 0
        %237 = vmatprep.subr.bf16.mxu0 0
        %238 = vmatpush1.bf16.msra.mxu0 0
        %239 = vmatprep.subr.bf16.mxu0 0
        %240 = vmatpush1.bf16.msra.mxu0 0
        %241 = vmatprep.subr.bf16.mxu0 0
        %242 = vmatpush1.bf16.msra.mxu0 0
        %243 = vmatprep.subr.bf16.mxu0 0
        %244 = vmatpush1.bf16.msra.mxu0 0
        %245 = vmatprep.mubr.bf16.mxu0 0
        %246 = vmatmul.mubr.bf16.gmra.mrb[0].mxu0 %v204
        %v247 = vpop.f32.mrb[0].mxu0
        %v248 = vadd.f32 0.0, %v247
        %v249 = vpop.f32.mrb[0].mxu0
        %v250 = vadd.f32 0.0, %v249
        %v251 = vpop.f32.mrb[0].mxu0
        %v252 = vpop.f32.mrb[0].mxu0
        %253 = vdwg.mxu0
        %v254 = vadd.f32 %v248, %v250
        %255 = vadd.xlane.f32.xlu0 %v254
        %v256 = vpop.xlane.xlu0 %255
        %v257 = vrot.slane %v256, 4
        %v258 = vadd.f32 %v256, %v257
        %v259 = vrot.slane %v258, 2
        %v260 = vadd.f32 %v258, %v259
        %v261 = vrot.slane %v260, 1
        %v262 = vadd.f32 %v260, %v261
        %s263 = vtos %v262
        %v264 = vstv %s263
        %v265 = vmul.f32 %v264, 0.00048828125
        %v266 = vsub.f32 %v248, %v265
        %v267 = vsub.f32 %v250, %v265
        %v268 = vmul.f32 %v266, %v266
        %v269 = vmul.f32 %v267, %v267
        %v270 = vadd.f32 %v268, %v269
        %271 = vadd.xlane.f32.xlu0 %v270
        %v272 = vpop.xlane.xlu0 %271
        %v273 = vrot.slane %v272, 4
        %v274 = vadd.f32 %v272, %v273
        %v275 = vrot.slane %v274, 2
        %v276 = vadd.f32 %v274, %v275
        %v277 = vrot.slane %v276, 1
        %v278 = vadd.f32 %v276, %v277
        %s279 = vtos %v278
        %v280 = vstv %s279
        %v281 = vmul.f32 %v280, 0.00048828125
        %v282 = vadd.f32 %v281, 1e-05
        %v283 = vrsqrt.pop %v282
        %v284 = vmul.f32 %v266, %v283
        %v285 = vmul.f32 %v267, %v283
        %287 = vset.pattern.permute.xlu0 0
        %288 = vperm.xlu0 %287, %v171
        %v289 = vpop.permute.xlu0 %288
        %v291 = vmul.f32 %v284, %v289
        %v292 = vmul.f32 %v285, %v289
        %293 = vset.pattern.permute.xlu0 1
        %294 = vperm.xlu0 %293, %v171
        %v295 = vpop.permute.xlu0 %294
        %v297 = vadd.f32 %v291, %v295
        %v298 = vadd.f32 %v292, %v295
        %v299 = vmul.f32 %v297, 0.5
        %v300 = vmul.f32 %v298, 0.5
        %v301 = vmul.f32 %v297, 0.70710677
        %v302 = vmul.f32 %v298, 0.70710677
        %v303 = vand.u32 2147483647, %v301
        %v304 = vand.u32 2147483647, %v302
        %v305 = vmul.f32 %v303, 0.3275911
        %v306 = vmul.f32 %v304, 0.3275911
        %v307 = vadd.f32 %v305, 1.0
        %v308 = vadd.f32 %v306, 1.0
        %v309 = vrcp.pop %v307
        %v310 = vrcp.pop %v308
        %v311 = vmul.f32 %v309, 1.0614054
        %v312 = vmul.f32 %v310, 1.0614054
        %v313 = vadd.f32 %v311, -1.4531521
        %v314 = vadd.f32 %v312, -1.4531521
        %v315 = vmul.f32 %v313, %v309
        %v316 = vmul.f32 %v314, %v310
        %v317 = vadd.f32 %v315, 1.4214138
        %v318 = vadd.f32 %v316, 1.4214138
        %v319 = vmul.f32 %v317, %v309
        %v320 = vmul.f32 %v318, %v310
        %v321 = vadd.f32 %v319, -0.28449672
        %v322 = vadd.f32 %v320, -0.28449672
        %v323 = vmul.f32 %v321, %v309
        %v324 = vmul.f32 %v322, %v310
        %v325 = vadd.f32 %v323, 0.2548296
        %v326 = vadd.f32 %v324, 0.2548296
        %v327 = vmul.f32 %v325, %v309
        %v328 = vmul.f32 %v326, %v310
        %v329 = vsub.f32 0.0, %v303
        %v330 = vsub.f32 0.0, %v304
        %v331 = vmul.f32 %v329, %v303
        %v332 = vmul.f32 %v330, %v304
        %v333 = vmul.f32 %v331, 1.442695
        %v334 = vpow.pop %v333
        %v335 = vmul.f32 %v332, 1.442695
        %v336 = vpow.pop %v335
        %v337 = vmul.f32 %v327, %v334
        %v338 = vmul.f32 %v328, %v336
        %v339 = vsub.f32 1.0, %v337
        %v340 = vsub.f32 1.0, %v338
        %vm341 = vcmp.ge.f32.partialorder %v301, 0.0
        %vm342 = vcmp.ge.f32.partialorder %v302, 0.0
        %v343 = vsub.f32 0.0, %v339
        %v344 = vsub.f32 0.0, %v340
        %v345 = vsel %vm341, %v339, %v343
        %v346 = vsel %vm342, %v340, %v344
        %v347 = vadd.f32 %v345, 1.0
        %v348 = vadd.f32 %v346, 1.0
        %v349 = vmul.f32 %v299, %v347
        %v350 = vmul.f32 %v300, %v348
        %351 = vst [vmem:[%s163] sm:$0xff] %v349
        %352 = vst [vmem:[%s163 + $0x8] sm:$0xff] %v350
        %s353 = sand.u32 %s93, 1
        %s354 = scalar_lea.sflag [#allocation3], %s353
        %s355 = sand.u32 %s93, 1
        %s356 = smul.addr %s355, 16
        %s357 = scalar_lea.vmem [#allocation2], %s356
        // Predicated region
        $region33: #{tpu_custom_call.1} parent=31 // pred_check
          %p358 = pneg %p103
        $region34: #{tpu_custom_call.1} parent=31 // pred_check_branch
          %360 = sbr.rel (%p358) target = $region36
        $region35: #{tpu_custom_call.1} parent=31 // pred_region
          %s362 = ssub.s32 256, 256
          %363 = vsyncadd %s354, %s362
          %s364 = smul.addr %s17, 2
          %s365 = smul.addr %s364, 128
          %s366 = scalar_lea.hbm %s3, %s365
          %s368 = sshll.u32 %s357, 4
          %s369 = int_to_ptr.vmem [resolvable:$true] %s368
          %371 = dma.vmem_to_hbm [thread:$0]  %s369, 256, %s366, %s354
        $region36: #{tpu_custom_call.1} parent=31 // pred_fallthru
          _
      $region32: #{tpu_custom_call.1} parent=5 // pred_fallthru
        _
      %p372 = scmp.le.s32.totalorder 2, %s12
      // Predicated region
      $region37: #{tpu_custom_call.1} parent=5 // pred_check
        %p373 = pneg %p372
      $region38: #{tpu_custom_call.1} parent=5 // pred_check_branch
        %375 = sbr.rel (%p373) target = $region40
      $region39: #{tpu_custom_call.1} parent=5 // pred_region
        %s376 = ssub.s32 %s12, 2
        // Predicated region
        $region41: #{tpu_custom_call.1} parent=39 // pred_check
          %p377 = pneg %p109
        $region42: #{tpu_custom_call.1} parent=39 // pred_check_branch
          %379 = sbr.rel (%p377) target = $region44
        $region43: #{tpu_custom_call.1} parent=39 // pred_region
          %s380 = sand.u32 %s94, 1
          %s381 = scalar_lea.sflag [#allocation3], %s380
          %s382 = sand.u32 %s94, 1
          %s383 = smul.addr %s382, 16
          %s384 = scalar_lea.vmem [#allocation2], %s383
          %385 = dma.done %s381, 256
        $region44: #{tpu_custom_call.1} parent=39 // pred_fallthru
          _
      $region40: #{tpu_custom_call.1} parent=5 // pred_fallthru
        _
    $region6: #{tpu_custom_call.1} parent=1 // loop_footer
      %s16 = sadd.s32 1, %s12
    $region7: #{tpu_custom_call.1} parent=1 // loop_footer_branch
      %11 = sbr.rel target = $region3
    $region8: #{tpu_custom_call.1} parent=1 // loop_exit
      _
    %386 = vsyncpa [#allocation3], 1
    %s387 = scalar_lea.sflag [#allocation3], 1
    %388 = vsyncpa %s387, 1

</llo_original>
